<compile_context>
chip_gen: v6e
topology: v6e:2x2x1
jax: 0.10.0
libtpu: 0.0.40
codegen_flags: <defaults>
</compile_context>

<pallas_src>
import math
import jax
import jax.numpy as jnp
from jax import lax
from jax.experimental import pallas as pl
from jax.experimental.pallas import tpu as pltpu

_INV_SQRT2 = 0.7071067811865475
_LN_EPS = 1e-5


def _decoder_kernel(x_ref, w1_ref, b1_ref, g_ref, beta_ref, w2_ref, b2_ref,
                    o_ref, h_scratch):
    """Grid: (M-tiles [parallel], V-tiles [arbitrary, innermost]).

    At the first vocab step of each M-tile we run dense1 + LayerNorm for that
    M-tile into a bf16 VMEM scratch; every vocab step then does the
    (tm, E) @ (E, tv) MXU matmul + bias + exact GELU in f32.
    """
    j = pl.program_id(1)  # vocab tile index (innermost, sequential)

    @pl.when(j == 0)
    def _():
        # dense1 (bf16 inputs, f32 accumulation) + bias
        h = jnp.dot(x_ref[...], w1_ref[...],
                    preferred_element_type=jnp.float32)
        h = h + b1_ref[...]                          # (tm, E) + (1, E), f32
        # One-pass LayerNorm statistics in f32.
        inv_e = 1.0 / h.shape[-1]
        mean = jnp.sum(h, axis=-1, keepdims=True) * inv_e
        msq = jnp.sum(h * h, axis=-1, keepdims=True) * inv_e
        var = msq - mean * mean
        hn = (h - mean) * lax.rsqrt(var + _LN_EPS)
        hn = hn * g_ref[...] + beta_ref[...]
        h_scratch[...] = hn.astype(jnp.bfloat16)

    # dense2 (bf16 inputs, f32 accumulation) + bias + exact erf GELU.
    z = jnp.dot(h_scratch[...], w2_ref[...],
                preferred_element_type=jnp.float32)
    z = z + b2_ref[...]                              # (tm, tv) + (1, tv)
    o_ref[...] = 0.5 * z * (1.0 + lax.erf(z * _INV_SQRT2))


def _round_up(n, m):
    return ((n + m - 1) // m) * m


def bert_decoder_forward(x, w1, b1, gamma, beta, w2, b2, *,
                         tile_m=256, tile_v=512,
                         vmem_limit_bytes=48 * 1024 * 1024):
    """x: (B, S, E) float32. Returns (B, S, V) float32."""
    B, S, E = x.shape
    V = w2.shape[1]
    M = B * S

    # Tile sizes: tm a multiple of 8 (sublane), tv a multiple of 128 (lane).
    tm = min(tile_m, _round_up(M, 8))
    tv = min(tile_v, _round_up(V, 128))
    Mp = _round_up(M, tm)
    Vp = _round_up(V, tv)

    # bf16 matmul operands (halves HBM streaming for W2 and x).
    x2d = x.reshape(M, E).astype(jnp.bfloat16)
    if Mp != M:
        x2d = jnp.pad(x2d, ((0, Mp - M), (0, 0)))
    w1b = w1.astype(jnp.bfloat16)
    w2b = w2.astype(jnp.bfloat16)
    b2p = b2
    if Vp != V:
        w2b = jnp.pad(w2b, ((0, 0), (0, Vp - V)))
        b2p = jnp.pad(b2p, ((0, Vp - V),))

    b1r = b1.reshape(1, E).astype(jnp.float32)
    gr = gamma.reshape(1, E).astype(jnp.float32)
    br = beta.reshape(1, E).astype(jnp.float32)
    b2r = b2p.reshape(1, Vp).astype(jnp.float32)

    grid = (Mp // tm, Vp // tv)

    # TODO(synk): W1/b1/gamma/beta are grid-invariant and could be single-
    # buffered (pipeline_mode=pl.Buffered(1)) to save VMEM at large E.
    out = pl.pallas_call(
        _decoder_kernel,
        out_shape=jax.ShapeDtypeStruct((Mp, Vp), jnp.float32),
        grid_spec=pltpu.PrefetchScalarGridSpec(
            num_scalar_prefetch=0,
            grid=grid,
            in_specs=[
                pl.BlockSpec((tm, E), lambda i, j: (i, 0)),    # x   (M-tiled)
                pl.BlockSpec((E, E), lambda i, j: (0, 0)),     # W1
                pl.BlockSpec((1, E), lambda i, j: (0, 0)),     # b1
                pl.BlockSpec((1, E), lambda i, j: (0, 0)),     # ln gamma
                pl.BlockSpec((1, E), lambda i, j: (0, 0)),     # ln beta
                pl.BlockSpec((E, tv), lambda i, j: (0, j)),    # W2  (V-tiled)
                pl.BlockSpec((1, tv), lambda i, j: (0, j)),    # b2  (V-tiled)
            ],
            out_specs=pl.BlockSpec((tm, tv), lambda i, j: (i, j)),
            scratch_shapes=[pltpu.VMEM((tm, E), jnp.bfloat16)],  # hn per M-tile
        ),
        compiler_params=pltpu.CompilerParams(
            # M-tiles can shard across TensorCores (v7x megacore); the vocab
            # axis carries the scratch and must stay sequential.
            dimension_semantics=("parallel", "arbitrary"),
            vmem_limit_bytes=vmem_limit_bytes,
        ),
    )(x2d, w1b, b1r, gr, br, w2b, b2r)

    out = out[:M, :V]
    return out.reshape(B, S, V)


def _reference_forward_bf16(x, w1, b1, gamma, beta, w2, b2):
    """Pure-JAX reference mimicking the kernel numerics (bf16 matmul inputs,
    f32 accumulation, f32 LayerNorm / GELU)."""
    h = jnp.einsum("bse,ef->bsf", x.astype(jnp.bfloat16),
                   w1.astype(jnp.bfloat16),
                   preferred_element_type=jnp.float32) + b1
    mean = jnp.mean(h, axis=-1, keepdims=True)
    var = jnp.mean((h - mean) ** 2, axis=-1, keepdims=True)
    hn = (h - mean) * lax.rsqrt(var + _LN_EPS) * gamma + beta
    z = jnp.einsum("bse,ev->bsv", hn.astype(jnp.bfloat16),
                   w2.astype(jnp.bfloat16),
                   preferred_element_type=jnp.float32) + b2
    return 0.5 * z * (1.0 + lax.erf(z * _INV_SQRT2))


def _reference_forward_f32(x, w1, b1, gamma, beta, w2, b2):
    """Full-f32 reference matching the torch module exactly."""
    h = jnp.einsum("bse,ef->bsf", x, w1) + b1
    mean = jnp.mean(h, axis=-1, keepdims=True)
    var = jnp.mean((h - mean) ** 2, axis=-1, keepdims=True)
    hn = (h - mean) / jnp.sqrt(var + _LN_EPS) * gamma + beta
    z = jnp.einsum("bse,ev->bsv", hn, w2) + b2
    return 0.5 * z * (1.0 + lax.erf(z * _INV_SQRT2))


if __name__ == "__main__":
    # Small, TPU-friendly shapes consistent with the module's forward:
    # x: (B, S, n_embed); dense2 maps n_embed -> n_tokens.
    B, S, E, V = 2, 8, 32, 512

    key = jax.random.PRNGKey(0)
    kx, kw1, kb1, kw2, kb2, kg, kbeta = jax.random.split(key, 7)

    x = jax.random.normal(kx, (B, S, E), dtype=jnp.float32)

    # Deterministic parameter init (PyTorch Linear-style uniform bounds).
    bound1 = 1.0 / math.sqrt(E)
    w1 = jax.random.uniform(kw1, (E, E), jnp.float32, -bound1, bound1)
    b1 = jax.random.uniform(kb1, (E,), jnp.float32, -bound1, bound1)
    w2 = jax.random.uniform(kw2, (E, V), jnp.float32, -bound1, bound1)
    b2 = jax.random.uniform(kb2, (V,), jnp.float32, -bound1, bound1)
    # LayerNorm affine params (perturbed from 1/0 so they actually matter).
    gamma = 1.0 + 0.1 * jax.random.normal(kg, (E,), dtype=jnp.float32)
    beta = 0.1 * jax.random.normal(kbeta, (E,), dtype=jnp.float32)

    # TODO(synk): Dropout layers are identity here (inference semantics); no
    # RNG dropout masks are applied inside the kernel.

    out = bert_decoder_forward(x, w1, b1, gamma, beta, w2, b2)
    out = jax.block_until_ready(out)

    assert out.shape == (B, S, V)

    # Tight check vs a reference with identical (bf16-matmul / f32-accum) numerics.
    ref_bf16 = _reference_forward_bf16(x, w1, b1, gamma, beta, w2, b2)
    assert jnp.allclose(out, ref_bf16, atol=1e-2, rtol=1e-2), \
        "mismatch vs bf16-matmul reference"

    # Looser sanity check vs the exact f32 torch-equivalent forward.
    ref_f32 = _reference_forward_f32(x, w1, b1, gamma, beta, w2, b2)
    assert jnp.allclose(out, ref_f32, atol=5e-2, rtol=5e-2), \
        "mismatch vs f32 reference"

    print("KERNEL_OK")
</pallas_src>

<mosaic_0001>
module attributes {stable_mosaic.version = 11 : i64} {
  func.func @_decoder_kernel(%arg0: i32, %arg1: i32, %arg2: memref<16x32xbf16, #tpu.memory_space<vmem>>, %arg3: memref<32x32xbf16, #tpu.memory_space<vmem>>, %arg4: memref<1x32xf32, #tpu.memory_space<vmem>>, %arg5: memref<1x32xf32, #tpu.memory_space<vmem>>, %arg6: memref<1x32xf32, #tpu.memory_space<vmem>>, %arg7: memref<32x512xbf16, #tpu.memory_space<vmem>>, %arg8: memref<1x512xf32, #tpu.memory_space<vmem>>, %arg9: memref<16x512xf32, #tpu.memory_space<vmem>>, %arg10: memref<16x32xbf16, #tpu.memory_space<vmem>>) attributes {dimension_semantics = [#tpu.dimension_semantics<parallel>, #tpu.dimension_semantics<arbitrary>], iteration_bounds = array<i64: 1, 1>, scalar_prefetch = 0 : i64, scratch_operands = 1 : i64, tpu.core_type = #tpu.core_type<tc>, window_params = [{transform_indices = @transform_0, window_bounds = array<i64: 16, 32>}, {pipeline_mode = #tpu.pipeline_mode<synchronous>, transform_indices = @transform_1, window_bounds = array<i64: 32, 32>}, {pipeline_mode = #tpu.pipeline_mode<synchronous>, transform_indices = @transform_2, window_bounds = array<i64: 1, 32>}, {pipeline_mode = #tpu.pipeline_mode<synchronous>, transform_indices = @transform_3, window_bounds = array<i64: 1, 32>}, {pipeline_mode = #tpu.pipeline_mode<synchronous>, transform_indices = @transform_4, window_bounds = array<i64: 1, 32>}, {transform_indices = @transform_5, window_bounds = array<i64: 32, 512>}, {transform_indices = @transform_6, window_bounds = array<i64: 1, 512>}, {transform_indices = @transform_7, window_bounds = array<i64: 16, 512>}]} {
    %c0_i32 = arith.constant 0 : i32
    %0 = arith.cmpi eq, %arg1, %c0_i32 : i32
    %1 = arith.extui %0 : i1 to i32
    %c0_i32_0 = arith.constant 0 : i32
    %2 = arith.cmpi ne, %1, %c0_i32_0 : i32
    scf.if %2 {
      %c0_11 = arith.constant 0 : index
      %c0_12 = arith.constant 0 : index
      %18 = vector.load %arg2[%c0_11, %c0_12] : memref<16x32xbf16, #tpu.memory_space<vmem>>, vector<16x32xbf16>
      %c0_13 = arith.constant 0 : index
      %c0_14 = arith.constant 0 : index
      %19 = vector.load %arg3[%c0_13, %c0_14] : memref<32x32xbf16, #tpu.memory_space<vmem>>, vector<32x32xbf16>
      %cst_15 = arith.constant dense<0.000000e+00> : vector<16x32xf32>
      %20 = tpu.matmul %18, %19, %cst_15 {dimension_numbers = #tpu.dot_dimension_numbers<[1], [0], [0], [1], [0, 0, 1, 1], [], []>} : vector<16x32xbf16>, vector<32x32xbf16>, vector<16x32xf32> -> vector<16x32xf32>
      %c0_16 = arith.constant 0 : index
      %c0_17 = arith.constant 0 : index
      %21 = vector.load %arg4[%c0_16, %c0_17] : memref<1x32xf32, #tpu.memory_space<vmem>>, vector<1x32xf32>
      %22 = vector.broadcast %21 : vector<1x32xf32> to vector<16x32xf32>
      %23 = arith.addf %20, %22 : vector<16x32xf32>
      %cst_18 = arith.constant dense<0.000000e+00> : vector<16xf32>
      %24 = vector.multi_reduction <add>, %23, %cst_18 [1] : vector<16x32xf32> to vector<16xf32>
      %25 = vector.shape_cast %24 : vector<16xf32> to vector<16x1xf32>
      %cst_19 = arith.constant 3.125000e-02 : f32
      %26 = vector.broadcast %cst_19 : f32 to vector<16x1xf32>
      %27 = arith.mulf %25, %26 : vector<16x1xf32>
      %28 = arith.mulf %23, %23 : vector<16x32xf32>
      %cst_20 = arith.constant dense<0.000000e+00> : vector<16xf32>
      %29 = vector.multi_reduction <add>, %28, %cst_20 [1] : vector<16x32xf32> to vector<16xf32>
      %30 = vector.shape_cast %29 : vector<16xf32> to vector<16x1xf32>
      %cst_21 = arith.constant 3.125000e-02 : f32
      %31 = vector.broadcast %cst_21 : f32 to vector<16x1xf32>
      %32 = arith.mulf %30, %31 : vector<16x1xf32>
      %33 = arith.mulf %27, %27 : vector<16x1xf32>
      %34 = arith.subf %32, %33 : vector<16x1xf32>
      %35 = vector.broadcast %27 : vector<16x1xf32> to vector<16x32xf32>
      %36 = arith.subf %23, %35 : vector<16x32xf32>
      %cst_22 = arith.constant 9.99999974E-6 : f32
      %37 = vector.broadcast %cst_22 : f32 to vector<16x1xf32>
      %38 = arith.addf %34, %37 : vector<16x1xf32>
      %39 = math.rsqrt %38 : vector<16x1xf32>
      %40 = vector.broadcast %39 : vector<16x1xf32> to vector<16x32xf32>
      %41 = arith.mulf %36, %40 : vector<16x32xf32>
      %c0_23 = arith.constant 0 : index
      %c0_24 = arith.constant 0 : index
      %42 = vector.load %arg5[%c0_23, %c0_24] : memref<1x32xf32, #tpu.memory_space<vmem>>, vector<1x32xf32>
      %43 = vector.broadcast %42 : vector<1x32xf32> to vector<16x32xf32>
      %44 = arith.mulf %41, %43 : vector<16x32xf32>
      %c0_25 = arith.constant 0 : index
      %c0_26 = arith.constant 0 : index
      %45 = vector.load %arg6[%c0_25, %c0_26] : memref<1x32xf32, #tpu.memory_space<vmem>>, vector<1x32xf32>
      %46 = vector.broadcast %45 : vector<1x32xf32> to vector<16x32xf32>
      %47 = arith.addf %44, %46 : vector<16x32xf32>
      %48 = arith.truncf %47 : vector<16x32xf32> to vector<16x32xbf16>
      %c0_27 = arith.constant 0 : index
      %c0_28 = arith.constant 0 : index
      %49 = vector.load %arg10[%c0_27, %c0_28] : memref<16x32xbf16, #tpu.memory_space<vmem>>, vector<16x32xbf16>
      tpu.vector_store %arg10[%c0_27, %c0_28], %48 {strides = array<i32>} : memref<16x32xbf16, #tpu.memory_space<vmem>>, vector<16x32xbf16>,
    } else {
    }
    %c0 = arith.constant 0 : index
    %c0_1 = arith.constant 0 : index
    %3 = vector.load %arg10[%c0, %c0_1] : memref<16x32xbf16, #tpu.memory_space<vmem>>, vector<16x32xbf16>
    %c0_2 = arith.constant 0 : index
    %c0_3 = arith.constant 0 : index
    %4 = vector.load %arg7[%c0_2, %c0_3] : memref<32x512xbf16, #tpu.memory_space<vmem>>, vector<32x512xbf16>
    %cst = arith.constant dense<0.000000e+00> : vector<16x512xf32>
    %5 = tpu.matmul %3, %4, %cst {dimension_numbers = #tpu.dot_dimension_numbers<[1], [0], [0], [1], [0, 0, 1, 1], [], []>} : vector<16x32xbf16>, vector<32x512xbf16>, vector<16x512xf32> -> vector<16x512xf32>
    %c0_4 = arith.constant 0 : index
    %c0_5 = arith.constant 0 : index
    %6 = vector.load %arg8[%c0_4, %c0_5] : memref<1x512xf32, #tpu.memory_space<vmem>>, vector<1x512xf32>
    %7 = vector.broadcast %6 : vector<1x512xf32> to vector<16x512xf32>
    %8 = arith.addf %5, %7 : vector<16x512xf32>
    %cst_6 = arith.constant 5.000000e-01 : f32
    %9 = vector.broadcast %cst_6 : f32 to vector<16x512xf32>
    %10 = arith.mulf %9, %8 : vector<16x512xf32>
    %cst_7 = arith.constant 0.707106769 : f32
    %11 = vector.broadcast %cst_7 : f32 to vector<16x512xf32>
    %12 = arith.mulf %8, %11 : vector<16x512xf32>
    %13 = math.erf %12 : vector<16x512xf32>
    %cst_8 = arith.constant 1.000000e+00 : f32
    %14 = vector.broadcast %cst_8 : f32 to vector<16x512xf32>
    %15 = arith.addf %14, %13 : vector<16x512xf32>
    %16 = arith.mulf %10, %15 : vector<16x512xf32>
    %c0_9 = arith.constant 0 : index
    %c0_10 = arith.constant 0 : index
    %17 = vector.load %arg9[%c0_9, %c0_10] : memref<16x512xf32, #tpu.memory_space<vmem>>, vector<16x512xf32>
    tpu.vector_store %arg9[%c0_9, %c0_10], %16 {strides = array<i32>} : memref<16x512xf32, #tpu.memory_space<vmem>>, vector<16x512xf32>,
    return
  }
  func.func @transform_0(%arg0: i32, %arg1: i32) -> (i32, i32) {
    %c0_i32 = arith.constant 0 : i32
    %c0_i32_0 = arith.constant 0 : i32
    return %arg0, %c0_i32 : i32, i32
  }
  func.func @transform_1(%arg0: i32, %arg1: i32) -> (i32, i32) {
    %c0_i32 = arith.constant 0 : i32
    %c0_i32_0 = arith.constant 0 : i32
    %c0_i32_1 = arith.constant 0 : i32
    return %c0_i32, %c0_i32_0 : i32, i32
  }
  func.func @transform_2(%arg0: i32, %arg1: i32) -> (i32, i32) {
    %c0_i32 = arith.constant 0 : i32
    %c0_i32_0 = arith.constant 0 : i32
    %c0_i32_1 = arith.constant 0 : i32
    return %c0_i32, %c0_i32_0 : i32, i32
  }
  func.func @transform_3(%arg0: i32, %arg1: i32) -> (i32, i32) {
    %c0_i32 = arith.constant 0 : i32
    %c0_i32_0 = arith.constant 0 : i32
    %c0_i32_1 = arith.constant 0 : i32
    return %c0_i32, %c0_i32_0 : i32, i32
  }
  func.func @transform_4(%arg0: i32, %arg1: i32) -> (i32, i32) {
    %c0_i32 = arith.constant 0 : i32
    %c0_i32_0 = arith.constant 0 : i32
    %c0_i32_1 = arith.constant 0 : i32
    return %c0_i32, %c0_i32_0 : i32, i32
  }
  func.func @transform_5(%arg0: i32, %arg1: i32) -> (i32, i32) {
    %c0_i32 = arith.constant 0 : i32
    %c0_i32_0 = arith.constant 0 : i32
    return %c0_i32, %arg1 : i32, i32
  }
  func.func @transform_6(%arg0: i32, %arg1: i32) -> (i32, i32) {
    %c0_i32 = arith.constant 0 : i32
    %c0_i32_0 = arith.constant 0 : i32
    return %c0_i32, %arg1 : i32, i32
  }
  func.func @transform_7(%arg0: i32, %arg1: i32) -> (i32, i32) {
    %c0_i32 = arith.constant 0 : i32
    return %arg0, %arg1 : i32, i32
  }
}

</mosaic_0001>

<llo_original>
// kernel: tpu_custom_call.1
$region0: #{tpu_custom_call.1}
  #allocation0 [shape = 'u32[]', space=smem, size = 0x4, offset = 0x4, fixed_abs, tag = 'smem constant byte address 0x4 - core index']
  #allocation1 [shape = 'u32[144,128]{1,0:T(1,128)}', space=vmem, size = 0x12000, scoped, tag = 'internal scratch']
  #allocation2 [shape = 'bf16[16,32]{1,0:T(8,128)(2,1)}', space=vmem, size = 0x1000, scoped, tag = 'scratch operand']
  %s0 = inlined_call_operand.hbm [shape: bf16[16,32], index: 0, kind: input, shape index: {}]
  %s1 = inlined_call_operand.hbm [shape: bf16[32,32], index: 1, kind: input, shape index: {}]
  %s2 = inlined_call_operand.vmem [shape: f32[1,32], index: 2, kind: input, shape index: {}]
  %s3 = inlined_call_operand.vmem [shape: f32[1,32], index: 3, kind: input, shape index: {}]
  %s4 = inlined_call_operand.vmem [shape: f32[1,32], index: 4, kind: input, shape index: {}]
  %s5 = inlined_call_operand.hbm [shape: bf16[32,512], index: 5, kind: input, shape index: {}]
  %s6 = inlined_call_operand.vmem [shape: f32[1,512], index: 6, kind: input, shape index: {}]
  %s7 = inlined_call_operand.hbm [shape: f32[16,512], index: 7, kind: output, shape index: {}]
  %s8 = sld [smem:[#allocation0]]
  $region54: #{tpu_custom_call.1} parent=0
    _
  %s10 = ssub.s32 1, %s8
  %s11 = scalar_select 0, %s10, %s8
  $region1: #{tpu_custom_call.1} parent=0
    #allocation3 [shape = 'u8[4096]{0}', space=vmem, size = 0x1000, scoped, tag = 'input window, operand 0, single buffered']
    #allocation4 [shape = 's32[1]{0}', space=sflag, size = 0x4, scoped, tag = 'scoped memory for tpu_custom_call.1']
    #allocation5 [shape = 's32[1]{0}', space=sflag, size = 0x4, scoped, tag = 'scoped memory for tpu_custom_call.1']
    #allocation6 [shape = 'u8[8192]{0}', space=vmem, size = 0x2000, scoped, tag = 'input window, operand 1, single buffered']
    #allocation7 [shape = 's32[1]{0}', space=sflag, size = 0x4, scoped, tag = 'scoped memory for tpu_custom_call.1']
    #allocation8 [shape = 'u8[32768]{0}', space=vmem, size = 0x8000, scoped, tag = 'input window, operand 5, single buffered']
    #allocation9 [shape = 'u8[32768]{0}', space=vmem, size = 0x8000, scoped, tag = 'output window, operand 0, single buffered']
    %12 = vsyncpa [#allocation4], 0
    %13 = vsyncpa [#allocation7], 0
    %14 = vsyncpa [#allocation5], 0
    // Predicated region
    $region2: #{tpu_custom_call.1} parent=1 // pred_check
      _
    $region3: #{tpu_custom_call.1} parent=1 // pred_check_branch
      %16 = sbr.rel (0) target = $region5
    $region4: #{tpu_custom_call.1} parent=1 // pred_region
      %s18 = ssub.s32 128, 128
      %19 = vsyncadd [#allocation4], %s18
      %s20 = sshll.u32 [#allocation3], 4
      %s21 = int_to_ptr.vmem [resolvable:$true] %s20
      %26 = dma.hbm_to_vmem [thread:$0]  %s0, 128, %s21, [#allocation4], 64, 64, 4
    $region5: #{tpu_custom_call.1} parent=1 // pred_fallthru
      _
    // Predicated region
    $region6: #{tpu_custom_call.1} parent=1 // pred_check
      _
    $region7: #{tpu_custom_call.1} parent=1 // pred_check_branch
      %28 = sbr.rel (0) target = $region9
    $region8: #{tpu_custom_call.1} parent=1 // pred_region
      %s30 = ssub.s32 256, 256
      %31 = vsyncadd [#allocation7], %s30
      %s32 = sshll.u32 [#allocation6], 4
      %s33 = int_to_ptr.vmem [resolvable:$true] %s32
      %38 = dma.hbm_to_vmem [thread:$0]  %s1, 256, %s33, [#allocation7], 64, 64, 4
    $region9: #{tpu_custom_call.1} parent=1 // pred_fallthru
      _
    // Predicated region
    $region10: #{tpu_custom_call.1} parent=1 // pred_check
      _
    $region11: #{tpu_custom_call.1} parent=1 // pred_check_branch
      %40 = sbr.rel (0) target = $region13
    $region12: #{tpu_custom_call.1} parent=1 // pred_region
      _
    $region13: #{tpu_custom_call.1} parent=1 // pred_fallthru
      _
    // Predicated region
    $region14: #{tpu_custom_call.1} parent=1 // pred_check
      _
    $region15: #{tpu_custom_call.1} parent=1 // pred_check_branch
      %42 = sbr.rel (0) target = $region17
    $region16: #{tpu_custom_call.1} parent=1 // pred_region
      _
    $region17: #{tpu_custom_call.1} parent=1 // pred_fallthru
      _
    // Predicated region
    $region18: #{tpu_custom_call.1} parent=1 // pred_check
      _
    $region19: #{tpu_custom_call.1} parent=1 // pred_check_branch
      %44 = sbr.rel (0) target = $region21
    $region20: #{tpu_custom_call.1} parent=1 // pred_region
      _
    $region21: #{tpu_custom_call.1} parent=1 // pred_fallthru
      _
    // Predicated region
    $region22: #{tpu_custom_call.1} parent=1 // pred_check
      _
    $region23: #{tpu_custom_call.1} parent=1 // pred_check_branch
      %46 = sbr.rel (0) target = $region25
    $region24: #{tpu_custom_call.1} parent=1 // pred_region
      %s48 = ssub.s32 1024, 1024
      %49 = vsyncadd [#allocation7], %s48
      %s50 = sshll.u32 [#allocation8], 4
      %s51 = int_to_ptr.vmem [resolvable:$true] %s50
      %56 = dma.hbm_to_vmem [thread:$0]  %s5, 1024, %s51, [#allocation7], 256, 256, 16
    $region25: #{tpu_custom_call.1} parent=1 // pred_fallthru
      _
    // Predicated region
    $region26: #{tpu_custom_call.1} parent=1 // pred_check
      _
    $region27: #{tpu_custom_call.1} parent=1 // pred_check_branch
      %58 = sbr.rel (0) target = $region29
    $region28: #{tpu_custom_call.1} parent=1 // pred_region
      _
    $region29: #{tpu_custom_call.1} parent=1 // pred_fallthru
      _
    // Predicated region
    $region30: #{tpu_custom_call.1} parent=1 // pred_check
      _
    $region31: #{tpu_custom_call.1} parent=1 // pred_check_branch
      %60 = sbr.rel (0) target = $region33
    $region32: #{tpu_custom_call.1} parent=1 // pred_region
      %61 = dma.done [#allocation4], 128
    $region33: #{tpu_custom_call.1} parent=1 // pred_fallthru
      _
    // Predicated region
    $region34: #{tpu_custom_call.1} parent=1 // pred_check
      _
    $region35: #{tpu_custom_call.1} parent=1 // pred_check_branch
      %63 = sbr.rel (0) target = $region37
    $region36: #{tpu_custom_call.1} parent=1 // pred_region
      %64 = dma.done [#allocation7], 256
    $region37: #{tpu_custom_call.1} parent=1 // pred_fallthru
      _
    // Predicated region
    $region38: #{tpu_custom_call.1} parent=1 // pred_check
      _
    $region39: #{tpu_custom_call.1} parent=1 // pred_check_branch
      %66 = sbr.rel (0) target = $region41
    $region40: #{tpu_custom_call.1} parent=1 // pred_region
      %67 = dma.done [#allocation7], 1024
    $region41: #{tpu_custom_call.1} parent=1 // pred_fallthru
      _
    %p69 = scmp.eq.s32.totalorder 0, 0
    // Predicated region
    $region42: #{tpu_custom_call.1} parent=1 // pred_check
      %p70 = pneg %p69
    $region43: #{tpu_custom_call.1} parent=1 // pred_check_branch
      %72 = sbr.rel (%p70) target = $region45
    $region44: #{tpu_custom_call.1} parent=1 // pred_region
      %v73 = vld [vmem:[#allocation3] sm:$0xf]
      %v74 = vld [vmem:[#allocation3 + $0x4] sm:$0xf]
      %v75 = vld [vmem:[#allocation6] sm:$0xf]
      %v76 = vld [vmem:[#allocation6 + $0x4] sm:$0xf]
      %v77 = vld [vmem:[#allocation6 + $0x8] sm:$0xf]
      %v78 = vld [vmem:[#allocation6 + $0xc] sm:$0xf]
      %v79 = vld [vmem:[%s2] sm:$0x1]
      %v81 = vlaneseq
      %v82 = vshrl.u32 %v81, 7
      %v83 = vsub.s32 0, %v82
      %v84 = vrot.slane %v79, %v83
      %v88 = vunpack.c.l.b16 %v73
      %v89 = vunpack.c.l.b16 %v74
      %v90 = vpack.c.b16 %v89, %v88
      %v95 = vunpack.c.l.b16 %v75
      %v96 = vunpack.c.l.b16 %v76
      %v97 = vunpack.c.l.b16 %v77
      %v98 = vunpack.c.l.b16 %v78
      %v99 = vpack.c.b16 %v96, %v95
      %v100 = vpack.c.b16 %v98, %v97
      %vm103 = vcmask 261120
      %v105 = vsel %vm103, %v90, 0
      %107 = vmatprep.subr.bf16.mxu0 0
      %108 = vmatpush1.bf16.msra.mxu0 0
      %109 = vmatprep.subr.bf16.mxu0 0
      %110 = vmatpush1.bf16.msra.mxu0 0
      %111 = vmatprep.subr.bf16.mxu0 0
      %112 = vmatpush1.bf16.msra.mxu0 0
      %113 = vmatprep.subr.bf16.mxu0 0
      %114 = vmatpush1.bf16.msra.mxu0 0
      %115 = vmatprep.subr.bf16.mxu0 0
      %116 = vmatpush1.bf16.msra.mxu0 0
      %117 = vmatprep.subr.bf16.mxu0 0
      %118 = vmatpush1.bf16.msra.mxu0 0
      %119 = vmatprep.subr.bf16.mxu0 0
      %120 = vmatpush1.bf16.msra.mxu0 %v100
      %121 = vmatprep.subr.bf16.mxu0 0
      %122 = vmatpush1.bf16.msra.mxu0 %v99
      %123 = vmatprep.subr.bf16.mxu0 0
      %124 = vmatpush2.bf16.msra.mxu0 0
      %125 = vmatprep.subr.bf16.mxu0 0
      %126 = vmatpush2.bf16.msra.mxu0 0
      %127 = vmatprep.subr.bf16.mxu0 0
      %128 = vmatpush2.bf16.msra.mxu0 0
      %129 = vmatprep.subr.bf16.mxu0 0
      %130 = vmatpush2.bf16.msra.mxu0 0
      %131 = vmatprep.subr.bf16.mxu0 0
      %132 = vmatpush2.bf16.msra.mxu0 0
      %133 = vmatprep.subr.bf16.mxu0 0
      %134 = vmatpush2.bf16.msra.mxu0 0
      %135 = vmatprep.subr.bf16.mxu0 0
      %136 = vmatpush2.bf16.msra.mxu0 0
      %137 = vmatprep.subr.bf16.mxu0 0
      %138 = vmatpush2.bf16.msra.mxu0 0
      %139 = vmatprep.mubr.bf16.mxu0 0
      %140 = vmatmul.mubr.bf16.gmra.mxu0 %v105
      %v141 = vpop.f32.mrf.mxu0
      %v142 = vadd.f32 %v84, %v141
      %v143 = vpop.f32.mrf.mxu0
      %v144 = vpop.f32.mrf.mxu0
      %v145 = vadd.f32 %v84, %v144
      %v146 = vpop.f32.mrf.mxu0
      %147 = vdwg.mxu0
      %v148 = vsel %vm103, %v142, 0.0
      %149 = vadd.xlane.f32.xlu0 %v148
      %v150 = vpop.xlane.xlu0 %149
      %v151 = vsel %vm103, %v145, 0.0
      %152 = vadd.xlane.f32.xlu0 %v151
      %v153 = vpop.xlane.xlu0 %152
      %v154 = vmul.f32 %v150, 0.03125
      %v155 = vmul.f32 %v153, 0.03125
      %v156 = vmul.f32 %v142, %v142
      %v157 = vmul.f32 %v145, %v145
      %v158 = vsel %vm103, %v156, 0.0
      %159 = vadd.xlane.f32.xlu0 %v158
      %v160 = vpop.xlane.xlu0 %159
      %v161 = vsel %vm103, %v157, 0.0
      %162 = vadd.xlane.f32.xlu0 %v161
      %v163 = vpop.xlane.xlu0 %162
      %v164 = vmul.f32 %v160, 0.03125
      %v165 = vmul.f32 %v163, 0.03125
      %v166 = vmul.f32 %v154, %v154
      %v167 = vmul.f32 %v155, %v155
      %v168 = vsub.f32 %v164, %v166
      %v169 = vsub.f32 %v165, %v167
      %v170 = vsub.f32 %v142, %v154
      %v171 = vsub.f32 %v145, %v155
      %v172 = vadd.f32 %v168, 1e-05
      %v173 = vadd.f32 %v169, 1e-05
      %v174 = vrsqrt.pop %v172
      %v175 = vrsqrt.pop %v173
      %v176 = vmul.f32 %v170, %v174
      %v177 = vmul.f32 %v171, %v175
      %v178 = vld [vmem:[%s3] sm:$0x1]
      %v180 = vlaneseq
      %v181 = vshrl.u32 %v180, 7
      %v182 = vsub.s32 0, %v181
      %v183 = vrot.slane %v178, %v182
      %v185 = vmul.f32 %v176, %v183
      %v186 = vmul.f32 %v177, %v183
      %v187 = vld [vmem:[%s4] sm:$0x1]
      %v189 = vlaneseq
      %v190 = vshrl.u32 %v189, 7
      %v191 = vsub.s32 0, %v190
      %v192 = vrot.slane %v187, %v191
      %v194 = vadd.f32 %v185, %v192
      %v195 = vadd.f32 %v186, %v192
      %v196 = vpack.c.bf16 %v195, %v194
      %v198 = vunpack.c.l.b16 %v196
      %v199 = vunpack.c.h.b16 %v196
      %v200 = vpack.c.b16 %v198, %v198
      %v201 = vpack.c.b16 %v199, %v199
      %vm204 = vcmask 257024
      %205 = vst.msk [vmem:[#allocation2] sm:$0xf] %vm204, %v200
      %206 = vst.msk [vmem:[#allocation2 + $0x4] sm:$0xf] %vm204, %v201
    $region45: #{tpu_custom_call.1} parent=1 // pred_fallthru
      _
    %v207 = vld [vmem:[#allocation2] sm:$0xf]
    %v208 = vld [vmem:[#allocation2 + $0x4] sm:$0xf]
    %v209 = vld [vmem:[#allocation8] sm:$0xff]
    %v210 = vld [vmem:[#allocation8 + $0x8] sm:$0xff]
    %v211 = vld [vmem:[#allocation8 + $0x10] sm:$0xff]
    %v212 = vld [vmem:[#allocation8 + $0x18] sm:$0xff]
    %v213 = vld [vmem:[#allocation8 + $0x20] sm:$0xff]
    %v214 = vld [vmem:[#allocation8 + $0x28] sm:$0xff]
    %v215 = vld [vmem:[#allocation8 + $0x30] sm:$0xff]
    %v216 = vld [vmem:[#allocation8 + $0x38] sm:$0xff]
    %v217 = vld [vmem:[%s6] sm:$0xf]
    %v219 = vlaneseq
    %v220 = vshrl.u32 %v219, 7
    %v221 = vsub.s32 0, %v220
    %v222 = vrot.slane %v217, %v221
    %v223 = vlaneseq
    %v224 = vshrl.u32 %v223, 7
    %v225 = vsub.s32 1, %v224
    %v226 = vrot.slane %v217, %v225
    %v227 = vlaneseq
    %v228 = vshrl.u32 %v227, 7
    %v229 = vsub.s32 2, %v228
    %v230 = vrot.slane %v217, %v229
    %v231 = vlaneseq
    %v232 = vshrl.u32 %v231, 7
    %v233 = vsub.s32 3, %v232
    %v234 = vrot.slane %v217, %v233
    %v241 = vunpack.c.l.b16 %v207
    %v242 = vunpack.c.l.b16 %v208
    %v243 = vpack.c.b16 %v242, %v241
    %v252 = vunpack.c.l.b16 %v209
    %v253 = vunpack.c.h.b16 %v209
    %v254 = vunpack.c.l.b16 %v210
    %v255 = vunpack.c.h.b16 %v210
    %v256 = vunpack.c.l.b16 %v211
    %v257 = vunpack.c.h.b16 %v211
    %v258 = vunpack.c.l.b16 %v212
    %v259 = vunpack.c.h.b16 %v212
    %v260 = vunpack.c.l.b16 %v213
    %v261 = vunpack.c.h.b16 %v213
    %v262 = vunpack.c.l.b16 %v214
    %v263 = vunpack.c.h.b16 %v214
    %v264 = vunpack.c.l.b16 %v215
    %v265 = vunpack.c.h.b16 %v215
    %v266 = vunpack.c.l.b16 %v216
    %v267 = vunpack.c.h.b16 %v216
    %v268 = vpack.c.b16 %v256, %v252
    %v269 = vpack.c.b16 %v257, %v253
    %v270 = vpack.c.b16 %v258, %v254
    %v271 = vpack.c.b16 %v259, %v255
    %v272 = vpack.c.b16 %v264, %v260
    %v273 = vpack.c.b16 %v265, %v261
    %v274 = vpack.c.b16 %v266, %v262
    %v275 = vpack.c.b16 %v267, %v263
    %vm284 = vcmask 261120
    %v286 = vsel %vm284, %v243, 0
    %288 = vmatprep.subr.bf16.mxu0 0
    %289 = vmatpush1.bf16.msra.mxu0 0
    %290 = vmatprep.subr.bf16.mxu0 0
    %291 = vmatpush1.bf16.msra.mxu0 0
    %292 = vmatprep.subr.bf16.mxu0 0
    %293 = vmatpush1.bf16.msra.mxu0 0
    %294 = vmatprep.subr.bf16.mxu0 0
    %295 = vmatpush1.bf16.msra.mxu0 0
    %296 = vmatprep.subr.bf16.mxu0 0
    %297 = vmatpush1.bf16.msra.mxu0 0
    %298 = vmatprep.subr.bf16.mxu0 0
    %299 = vmatpush1.bf16.msra.mxu0 0
    %300 = vmatprep.subr.bf16.mxu0 %v273
    %301 = vmatpush1.bf16.msra.mxu0 %v272
    %302 = vmatprep.subr.bf16.mxu0 %v269
    %303 = vmatpush1.bf16.msra.mxu0 %v268
    %304 = vmatprep.subr.bf16.mxu0 0
    %305 = vmatpush2.bf16.msra.mxu0 0
    %306 = vmatprep.subr.bf16.mxu0 0
    %307 = vmatpush2.bf16.msra.mxu0 0
    %308 = vmatprep.subr.bf16.mxu0 0
    %309 = vmatpush2.bf16.msra.mxu0 0
    %310 = vmatprep.subr.bf16.mxu0 0
    %311 = vmatpush2.bf16.msra.mxu0 0
    %312 = vmatprep.subr.bf16.mxu0 0
    %313 = vmatpush2.bf16.msra.mxu0 0
    %314 = vmatprep.subr.bf16.mxu0 0
    %315 = vmatpush2.bf16.msra.mxu0 0
    %316 = vmatprep.subr.bf16.mxu0 0
    %317 = vmatpush2.bf16.msra.mxu0 0
    %318 = vmatprep.subr.bf16.mxu0 0
    %319 = vmatpush2.bf16.msra.mxu0 0
    %320 = vmatprep.mubr.bf16.mxu0 0
    %321 = vmatmul.mubr.bf16.gmra.mxu0 %v286
    %v322 = vpop.f32.mrf.mxu0
    %v323 = vadd.f32 %v222, %v322
    %v324 = vpop.f32.mrf.mxu0
    %v325 = vadd.f32 %v226, %v324
    %v326 = vpop.f32.mrf.mxu0
    %v327 = vadd.f32 %v222, %v326
    %v328 = vpop.f32.mrf.mxu0
    %v329 = vadd.f32 %v226, %v328
    %330 = vdwg.mxu0
    %331 = vmatprep.subr.bf16.mxu0 0
    %332 = vmatpush1.bf16.msra.mxu0 0
    %333 = vmatprep.subr.bf16.mxu0 0
    %334 = vmatpush1.bf16.msra.mxu0 0
    %335 = vmatprep.subr.bf16.mxu0 0
    %336 = vmatpush1.bf16.msra.mxu0 0
    %337 = vmatprep.subr.bf16.mxu0 0
    %338 = vmatpush1.bf16.msra.mxu0 0
    %339 = vmatprep.subr.bf16.mxu0 0
    %340 = vmatpush1.bf16.msra.mxu0 0
    %341 = vmatprep.subr.bf16.mxu0 0
    %342 = vmatpush1.bf16.msra.mxu0 0
    %343 = vmatprep.subr.bf16.mxu0 %v275
    %344 = vmatpush1.bf16.msra.mxu0 %v274
    %345 = vmatprep.subr.bf16.mxu0 %v271
    %346 = vmatpush1.bf16.msra.mxu0 %v270
    %347 = vmatprep.subr.bf16.mxu0 0
    %348 = vmatpush2.bf16.msra.mxu0 0
    %349 = vmatprep.subr.bf16.mxu0 0
    %350 = vmatpush2.bf16.msra.mxu0 0
    %351 = vmatprep.subr.bf16.mxu0 0
    %352 = vmatpush2.bf16.msra.mxu0 0
    %353 = vmatprep.subr.bf16.mxu0 0
    %354 = vmatpush2.bf16.msra.mxu0 0
    %355 = vmatprep.subr.bf16.mxu0 0
    %356 = vmatpush2.bf16.msra.mxu0 0
    %357 = vmatprep.subr.bf16.mxu0 0
    %358 = vmatpush2.bf16.msra.mxu0 0
    %359 = vmatprep.subr.bf16.mxu0 0
    %360 = vmatpush2.bf16.msra.mxu0 0
    %361 = vmatprep.subr.bf16.mxu0 0
    %362 = vmatpush2.bf16.msra.mxu0 0
    %363 = vmatprep.mubr.bf16.mxu0 0
    %364 = vmatmul.mubr.bf16.gmra.mxu0 %v286
    %v365 = vpop.f32.mrf.mxu0
    %v366 = vadd.f32 %v230, %v365
    %v367 = vpop.f32.mrf.mxu0
    %v368 = vadd.f32 %v234, %v367
    %v369 = vpop.f32.mrf.mxu0
    %v370 = vadd.f32 %v230, %v369
    %v371 = vpop.f32.mrf.mxu0
    %v372 = vadd.f32 %v234, %v371
    %373 = vdwg.mxu0
    %v374 = vmul.f32 %v323, 0.5
    %v375 = vmul.f32 %v325, 0.5
    %v376 = vmul.f32 %v366, 0.5
    %v377 = vmul.f32 %v368, 0.5
    %v378 = vmul.f32 %v327, 0.5
    %v379 = vmul.f32 %v329, 0.5
    %v380 = vmul.f32 %v370, 0.5
    %v381 = vmul.f32 %v372, 0.5
    %v382 = vmul.f32 %v323, 0.70710677
    %v383 = vmul.f32 %v325, 0.70710677
    %v384 = vmul.f32 %v366, 0.70710677
    %v385 = vmul.f32 %v368, 0.70710677
    %v386 = vmul.f32 %v327, 0.70710677
    %v387 = vmul.f32 %v329, 0.70710677
    %v388 = vmul.f32 %v370, 0.70710677
    %v389 = vmul.f32 %v372, 0.70710677
    %v390 = verf.f32.pop %v382
    %v391 = verf.f32.pop %v383
    %v392 = verf.f32.pop %v384
    %v393 = verf.f32.pop %v385
    %v394 = verf.f32.pop %v386
    %v395 = verf.f32.pop %v387
    %v396 = verf.f32.pop %v388
    %v397 = verf.f32.pop %v389
    %v398 = vadd.f32 %v390, 1.0
    %v399 = vadd.f32 %v391, 1.0
    %v400 = vadd.f32 %v392, 1.0
    %v401 = vadd.f32 %v393, 1.0
    %v402 = vadd.f32 %v394, 1.0
    %v403 = vadd.f32 %v395, 1.0
    %v404 = vadd.f32 %v396, 1.0
    %v405 = vadd.f32 %v397, 1.0
    %v406 = vmul.f32 %v374, %v398
    %v407 = vmul.f32 %v375, %v399
    %v408 = vmul.f32 %v376, %v400
    %v409 = vmul.f32 %v377, %v401
    %v410 = vmul.f32 %v378, %v402
    %v411 = vmul.f32 %v379, %v403
    %v412 = vmul.f32 %v380, %v404
    %v413 = vmul.f32 %v381, %v405
    %414 = vst [vmem:[#allocation9] sm:$0xff] %v406
    %415 = vst [vmem:[#allocation9 + $0x8] sm:$0xff] %v407
    %416 = vst [vmem:[#allocation9 + $0x10] sm:$0xff] %v408
    %417 = vst [vmem:[#allocation9 + $0x18] sm:$0xff] %v409
    %418 = vst [vmem:[#allocation9 + $0x20] sm:$0xff] %v410
    %419 = vst [vmem:[#allocation9 + $0x28] sm:$0xff] %v411
    %420 = vst [vmem:[#allocation9 + $0x30] sm:$0xff] %v412
    %421 = vst [vmem:[#allocation9 + $0x38] sm:$0xff] %v413
    // Predicated region
    $region46: #{tpu_custom_call.1} parent=1 // pred_check
      _
    $region47: #{tpu_custom_call.1} parent=1 // pred_check_branch
      %423 = sbr.rel (0) target = $region49
    $region48: #{tpu_custom_call.1} parent=1 // pred_region
      %s425 = ssub.s32 1024, 1024
      %426 = vsyncadd [#allocation5], %s425
      %s427 = sshll.u32 [#allocation9], 4
      %s428 = int_to_ptr.vmem [resolvable:$true] %s427
      %433 = dma.vmem_to_hbm [thread:$0]  %s428, 1024, %s7, [#allocation5], 512, 512, 32
    $region49: #{tpu_custom_call.1} parent=1 // pred_fallthru
      _
    // Predicated region
    $region50: #{tpu_custom_call.1} parent=1 // pred_check
      _
    $region51: #{tpu_custom_call.1} parent=1 // pred_check_branch
      %435 = sbr.rel (0) target = $region53
    $region52: #{tpu_custom_call.1} parent=1 // pred_region
      %436 = dma.done [#allocation5], 1024
    $region53: #{tpu_custom_call.1} parent=1 // pred_fallthru
      _
    %437 = vsyncpa [#allocation4], 1
    %438 = vsyncpa [#allocation7], 1
    %439 = vsyncpa [#allocation5], 1

</llo_original>
